<compile_context>
chip_gen: v7x
topology: tpu7x:2x2x1
jax: 0.10.0
libtpu: 0.0.40
codegen_flags: <defaults>
</compile_context>

<pallas_src>
import functools

import jax
import jax.numpy as jnp
from jax.experimental import pallas as pl
from jax.experimental.pallas import tpu as pltpu


def gce_kernel(logits_ref, targets_ref, total_ref, count_ref, *, q, n_rows, tn):
    logits = logits_ref[...].astype(jnp.float32)            # [TN, C]
    tgt = targets_ref[...]                                   # [TN, 1] int32
    _, c = logits.shape

    # Row validity: not the ignore index AND inside the real (unpadded) range.
    base = pl.program_id(0) * tn
    row_ids = base + jax.lax.broadcasted_iota(jnp.int32, (tn, 1), 0)
    valid = (tgt != -100) & (row_ids < n_rows)                # [TN, 1] bool

    # Softmax pieces (numerically stable).
    row_max = jnp.max(logits, axis=-1, keepdims=True)         # [TN, 1]
    ex = jnp.exp(logits - row_max)                            # [TN, C]
    denom = jnp.sum(ex, axis=-1, keepdims=True)               # [TN, 1]

    # Gather exp(logit_target - row_max) by reusing `ex` (no one-hot f32 pass).
    class_ids = jax.lax.broadcasted_iota(jnp.int32, (tn, c), 1)
    p_num = jnp.sum(jnp.where(class_ids == tgt, ex, 0.0),
                    axis=-1, keepdims=True)                   # [TN, 1]

    # p**q in log space: exp(q * (log p_num - log denom)).
    #   invalid rows: p_num == 0 -> log = -inf -> pq = 0 -> loss masked to 0.
    pq = jnp.exp(q * (jnp.log(p_num) - jnp.log(denom)))       # [TN, 1]
    loss = (1.0 - pq) / q
    loss = jnp.where(valid, loss, 0.0)

    total = jnp.sum(loss)
    count = jnp.sum(valid.astype(jnp.float32))

    # Lane-dense partials; wrapper reads lane 0 of each block row.
    total_ref[...] = jnp.full(total_ref.shape, total, dtype=jnp.float32)
    count_ref[...] = jnp.full(count_ref.shape, count, dtype=jnp.float32)


def gce_loss(logits, targets, q=0.7):
    n, c = logits.shape
    targets2d = targets.reshape(n, 1).astype(jnp.int32)

    itemsize = jnp.dtype(logits.dtype).itemsize
    # Largest row tile such that one logits buffer is <= ~8 MiB
    # (2x for double buffering still fits every generation's scoped VMEM).
    tn = (8 * 1024 * 1024) // max(1, c * itemsize)
    tn = max(8, min(1024, (tn // 8) * 8))
    tn = min(tn, ((n + 7) // 8) * 8)          # don't exceed (padded) N
    num_blocks = pl.cdiv(n, tn)

    tile_bytes = tn * c * itemsize + tn * 4
    vmem_limit = int(min(48 * 1024 * 1024,
                         max(8 * 1024 * 1024, 3 * tile_bytes)))

    kernel = functools.partial(gce_kernel, q=q, n_rows=n, tn=tn)
    total_p, count_p = pl.pallas_call(
        kernel,
        out_shape=(
            jax.ShapeDtypeStruct((num_blocks, 128), jnp.float32),
            jax.ShapeDtypeStruct((num_blocks, 128), jnp.float32),
        ),
        grid=(num_blocks,),
        in_specs=[
            pl.BlockSpec((tn, c), lambda i: (i, 0)),   # logits tile (native dtype)
            pl.BlockSpec((tn, 1), lambda i: (i, 0)),   # targets tile
        ],
        out_specs=(
            pl.BlockSpec((1, 128), lambda i: (i, 0)),  # per-block total
            pl.BlockSpec((1, 128), lambda i: (i, 0)),  # per-block count
        ),
        compiler_params=pltpu.CompilerParams(
            dimension_semantics=("parallel",),
            vmem_limit_bytes=vmem_limit,
        ),
    )(logits, targets2d)

    # Final tiny reduction in plain JAX. 0 valid rows -> 0/0 -> NaN (matches torch).
    return jnp.sum(total_p[:, 0]) / jnp.sum(count_p[:, 0])


def gce_loss_ref(logits, targets, q=0.7):
    """Pure-JAX reference mirroring the PyTorch module."""
    valid = targets != -100
    probs = jax.nn.softmax(logits.astype(jnp.float32), axis=-1)
    p = jnp.take_along_axis(
        probs, jnp.clip(targets, 0, logits.shape[-1] - 1)[:, None], axis=-1
    )[:, 0]
    loss = (1.0 - jnp.power(p, q)) / q
    loss = jnp.where(valid, loss, 0.0)
    return jnp.sum(loss) / jnp.sum(valid.astype(jnp.float32))


if __name__ == "__main__":
    key = jax.random.PRNGKey(0)
    k_logits, k_tgt = jax.random.split(key)

    N, C = 64, 32                      # e.g. batch=8 * seq=8 rows, 32 classes
    logits = jax.random.normal(k_logits, (N, C), dtype=jnp.float32)
    targets = jax.random.randint(k_tgt, (N,), 0, C, dtype=jnp.int32)
    # mark every 5th row as ignored (-100), deterministically
    ignore = (jnp.arange(N) % 5) == 0
    targets = jnp.where(ignore, jnp.int32(-100), targets)

    out = gce_loss(logits, targets, q=0.7)
    out = jax.block_until_ready(out)

    ref = gce_loss_ref(logits, targets, q=0.7)
    assert jnp.allclose(out, ref, rtol=1e-5, atol=1e-5), (out, ref)

    print("KERNEL_OK")
</pallas_src>

<mosaic_0001>
module attributes {stable_mosaic.version = 11 : i64} {
  func.func @gce_kernel(%arg0: i32, %arg1: memref<64x32xf32, #tpu.memory_space<vmem>>, %arg2: memref<64x1xi32, #tpu.memory_space<vmem>>, %arg3: memref<1x128xf32, #tpu.memory_space<vmem>>, %arg4: memref<1x128xf32, #tpu.memory_space<vmem>>) attributes {dimension_semantics = [#tpu.dimension_semantics<parallel>], iteration_bounds = array<i64: 1>, scalar_prefetch = 0 : i64, scratch_operands = 0 : i64, tpu.core_type = #tpu.core_type<tc>, window_params = [{transform_indices = @transform_0, window_bounds = array<i64: 64, 32>}, {transform_indices = @transform_1, window_bounds = array<i64: 64, 1>}, {transform_indices = @transform_2, window_bounds = array<i64: 1, 128>}, {transform_indices = @transform_3, window_bounds = array<i64: 1, 128>}]} {
    %c0 = arith.constant 0 : index
    %c0_0 = arith.constant 0 : index
    %0 = vector.load %arg1[%c0, %c0_0] : memref<64x32xf32, #tpu.memory_space<vmem>>, vector<64x32xf32>
    %c0_1 = arith.constant 0 : index
    %c0_2 = arith.constant 0 : index
    %1 = vector.load %arg2[%c0_1, %c0_2] : memref<64x1xi32, #tpu.memory_space<vmem>>, vector<64x1xi32>
    %c64_i32 = arith.constant 64 : i32
    %2 = arith.muli %arg0, %c64_i32 : i32
    %3 = tpu.iota {dimensions = array<i32: 0>} : vector<64x1xi32>
    %4 = vector.broadcast %2 : i32 to vector<64x1xi32>
    %5 = arith.addi %4, %3 : vector<64x1xi32>
    %c-100_i32 = arith.constant -100 : i32
    %6 = vector.broadcast %c-100_i32 : i32 to vector<64x1xi32>
    %7 = arith.cmpi ne, %1, %6 : vector<64x1xi32>
    %c64_i32_3 = arith.constant 64 : i32
    %8 = vector.broadcast %c64_i32_3 : i32 to vector<64x1xi32>
    %9 = arith.cmpi slt, %5, %8 : vector<64x1xi32>
    %10 = arith.andi %7, %9 : vector<64x1xi1>
    %cst = arith.constant dense<0xFF800000> : vector<64xf32>
    %11 = vector.multi_reduction <maximumf>, %0, %cst [1] : vector<64x32xf32> to vector<64xf32>
    %12 = vector.shape_cast %11 : vector<64xf32> to vector<64x1xf32>
    %13 = vector.broadcast %12 : vector<64x1xf32> to vector<64x32xf32>
    %14 = arith.subf %0, %13 : vector<64x32xf32>
    %15 = math.exp %14 : vector<64x32xf32>
    %cst_4 = arith.constant dense<0.000000e+00> : vector<64xf32>
    %16 = vector.multi_reduction <add>, %15, %cst_4 [1] : vector<64x32xf32> to vector<64xf32>
    %17 = vector.shape_cast %16 : vector<64xf32> to vector<64x1xf32>
    %18 = tpu.iota {dimensions = array<i32: 1>} : vector<64x32xi32>
    %19 = vector.broadcast %1 : vector<64x1xi32> to vector<64x32xi32>
    %20 = arith.cmpi eq, %18, %19 : vector<64x32xi32>
    %cst_5 = arith.constant 0.000000e+00 : f32
    %21 = vector.broadcast %cst_5 : f32 to vector<64x32xf32>
    %22 = arith.select %20, %15, %21 : vector<64x32xi1>, vector<64x32xf32>
    %cst_6 = arith.constant dense<0.000000e+00> : vector<64xf32>
    %23 = vector.multi_reduction <add>, %22, %cst_6 [1] : vector<64x32xf32> to vector<64xf32>
    %24 = vector.shape_cast %23 : vector<64xf32> to vector<64x1xf32>
    %25 = math.log %24 : vector<64x1xf32>
    %26 = math.log %17 : vector<64x1xf32>
    %27 = arith.subf %25, %26 : vector<64x1xf32>
    %cst_7 = arith.constant 0.699999988 : f32
    %28 = vector.broadcast %cst_7 : f32 to vector<64x1xf32>
    %29 = arith.mulf %28, %27 : vector<64x1xf32>
    %30 = math.exp %29 : vector<64x1xf32>
    %cst_8 = arith.constant 1.000000e+00 : f32
    %31 = vector.broadcast %cst_8 : f32 to vector<64x1xf32>
    %32 = arith.subf %31, %30 : vector<64x1xf32>
    %cst_9 = arith.constant 0.699999988 : f32
    %33 = vector.broadcast %cst_9 : f32 to vector<64x1xf32>
    %34 = arith.divf %32, %33 : vector<64x1xf32>
    %cst_10 = arith.constant 0.000000e+00 : f32
    %35 = vector.broadcast %cst_10 : f32 to vector<64x1xf32>
    %36 = arith.select %10, %34, %35 : vector<64x1xi1>, vector<64x1xf32>
    %37 = vector.shape_cast %36 : vector<64x1xf32> to vector<1x64x1xf32>
    %cst_11 = arith.constant dense<0.000000e+00> : vector<1xf32>
    %38 = vector.multi_reduction <add>, %37, %cst_11 [1, 2] : vector<1x64x1xf32> to vector<1xf32>
    %39 = vector.shape_cast %38 : vector<1xf32> to vector<1x1x1xf32>
    %40 = vector.extract %39[0, 0, 0] : f32 from vector<1x1x1xf32>
    %41 = arith.extui %10 : vector<64x1xi1> to vector<64x1xi32>
    %42 = arith.sitofp %41 : vector<64x1xi32> to vector<64x1xf32>
    %43 = vector.shape_cast %42 : vector<64x1xf32> to vector<1x64x1xf32>
    %cst_12 = arith.constant dense<0.000000e+00> : vector<1xf32>
    %44 = vector.multi_reduction <add>, %43, %cst_12 [1, 2] : vector<1x64x1xf32> to vector<1xf32>
    %45 = vector.shape_cast %44 : vector<1xf32> to vector<1x1x1xf32>
    %46 = vector.extract %45[0, 0, 0] : f32 from vector<1x1x1xf32>
    %47 = vector.broadcast %40 : f32 to vector<1x128xf32>
    %c0_13 = arith.constant 0 : index
    %c0_14 = arith.constant 0 : index
    %48 = vector.load %arg3[%c0_13, %c0_14] : memref<1x128xf32, #tpu.memory_space<vmem>>, vector<1x128xf32>
    tpu.vector_store %arg3[%c0_13, %c0_14], %47 {strides = array<i32>} : memref<1x128xf32, #tpu.memory_space<vmem>>, vector<1x128xf32>,
    %49 = vector.broadcast %46 : f32 to vector<1x128xf32>
    %c0_15 = arith.constant 0 : index
    %c0_16 = arith.constant 0 : index
    %50 = vector.load %arg4[%c0_15, %c0_16] : memref<1x128xf32, #tpu.memory_space<vmem>>, vector<1x128xf32>
    tpu.vector_store %arg4[%c0_15, %c0_16], %49 {strides = array<i32>} : memref<1x128xf32, #tpu.memory_space<vmem>>, vector<1x128xf32>,
    return
  }
  func.func @transform_0(%arg0: i32) -> (i32, i32) {
    %c0_i32 = arith.constant 0 : i32
    %c0_i32_0 = arith.constant 0 : i32
    return %arg0, %c0_i32 : i32, i32
  }
  func.func @transform_1(%arg0: i32) -> (i32, i32) {
    %c0_i32 = arith.constant 0 : i32
    %c0_i32_0 = arith.constant 0 : i32
    return %arg0, %c0_i32 : i32, i32
  }
  func.func @transform_2(%arg0: i32) -> (i32, i32) {
    %c0_i32 = arith.constant 0 : i32
    %c0_i32_0 = arith.constant 0 : i32
    return %arg0, %c0_i32 : i32, i32
  }
  func.func @transform_3(%arg0: i32) -> (i32, i32) {
    %c0_i32 = arith.constant 0 : i32
    %c0_i32_0 = arith.constant 0 : i32
    return %arg0, %c0_i32 : i32, i32
  }
}

</mosaic_0001>

<llo_original>
// kernel: tpu_custom_call.1
$region0: #{tpu_custom_call.1}
  #allocation0 [shape = 'u32[]', space=smem, size = 0x4, offset = 0x4, fixed_abs, tag = 'smem constant byte address 0x4 - core index']
  #allocation1 [shape = 'u32[144,128]{1,0:T(1,128)}', space=vmem, size = 0x12000, scoped, tag = 'internal scratch']
  %s0 = inlined_call_operand.vmem [shape: f32[64,32], index: 0, kind: input, shape index: {}]
  %s1 = inlined_call_operand.vmem [shape: s32[64,1], index: 1, kind: input, shape index: {}]
  %s2 = inlined_call_operand.hbm [shape: f32[1,128], index: 2, kind: output, shape index: {0}]
  %s3 = inlined_call_operand.hbm [shape: f32[1,128], index: 3, kind: output, shape index: {1}]
  %4 = xla_tuple %s2, %s3
  %s5 = sld [smem:[#allocation0]]
  $region26: #{tpu_custom_call.1} parent=0
    _
  %s7 = ssub.s32 1, %s5
  %s8 = scalar_select 0, %s7, %s5
  $region1: #{tpu_custom_call.1} parent=0
    #allocation2 [shape = 'u8[512]{0}', space=vmem, size = 0x400, scoped, tag = 'output window, operand 0, single buffered']
    #allocation3 [shape = 's32[1]{0}', space=sflag, size = 0x4, scoped, tag = 'scoped memory for tpu_custom_call.1']
    #allocation4 [shape = 'u8[512]{0}', space=vmem, size = 0x400, scoped, tag = 'output window, operand 1, single buffered']
    #allocation5 [shape = 's32[1]{0}', space=sflag, size = 0x4, scoped, tag = 'scoped memory for tpu_custom_call.1']
    %9 = vsyncpa [#allocation3], 0
    %10 = vsyncpa [#allocation5], 0
    // Predicated region
    $region2: #{tpu_custom_call.1} parent=1 // pred_check
      _
    $region3: #{tpu_custom_call.1} parent=1 // pred_check_branch
      %12 = sbr.rel (0) target = $region5
    $region4: #{tpu_custom_call.1} parent=1 // pred_region
      _
    $region5: #{tpu_custom_call.1} parent=1 // pred_fallthru
      _
    // Predicated region
    $region6: #{tpu_custom_call.1} parent=1 // pred_check
      _
    $region7: #{tpu_custom_call.1} parent=1 // pred_check_branch
      %14 = sbr.rel (0) target = $region9
    $region8: #{tpu_custom_call.1} parent=1 // pred_region
      _
    $region9: #{tpu_custom_call.1} parent=1 // pred_fallthru
      _
    %v15 = vld [vmem:[%s0] sm:$0xff]
    %v16 = vld [vmem:[%s0 + $0x8] sm:$0xff]
    %v17 = vld [vmem:[%s0 + $0x10] sm:$0xff]
    %v18 = vld [vmem:[%s0 + $0x18] sm:$0xff]
    %v19 = vld [vmem:[%s0 + $0x20] sm:$0xff]
    %v20 = vld [vmem:[%s0 + $0x28] sm:$0xff]
    %v21 = vld [vmem:[%s0 + $0x30] sm:$0xff]
    %v22 = vld [vmem:[%s0 + $0x38] sm:$0xff]
    %v23 = vld [vmem:[%s1] sm:$0xff]
    %v24 = vld [vmem:[%s1 + $0x8] sm:$0xff]
    %v25 = vld [vmem:[%s1 + $0x10] sm:$0xff]
    %v26 = vld [vmem:[%s1 + $0x18] sm:$0xff]
    %v27 = vld [vmem:[%s1 + $0x20] sm:$0xff]
    %v28 = vld [vmem:[%s1 + $0x28] sm:$0xff]
    %v29 = vld [vmem:[%s1 + $0x30] sm:$0xff]
    %v30 = vld [vmem:[%s1 + $0x38] sm:$0xff]
    %s31 = smul.u32 0, 64
    %v32 = vlaneseq
    %v33 = vshrl.u32 %v32, 7
    %v34 = vadd.s32 %v33, 8
    %v35 = vadd.s32 %v33, 16
    %v36 = vadd.s32 %v33, 24
    %v37 = vadd.s32 %v33, 32
    %v38 = vadd.s32 %v33, 40
    %v39 = vadd.s32 %v33, 48
    %v40 = vadd.s32 %v33, 56
    %v41 = vstv %s31
    %v42 = vadd.s32 %v41, %v33
    %v43 = vadd.s32 %v41, %v34
    %v44 = vadd.s32 %v41, %v35
    %v45 = vadd.s32 %v41, %v36
    %v46 = vadd.s32 %v41, %v37
    %v47 = vadd.s32 %v41, %v38
    %v48 = vadd.s32 %v41, %v39
    %v49 = vadd.s32 %v41, %v40
    %vm50 = vcmp.ne.s32.totalorder %v23, 4294967196
    %vm51 = vcmp.ne.s32.totalorder %v24, 4294967196
    %vm52 = vcmp.ne.s32.totalorder %v25, 4294967196
    %vm53 = vcmp.ne.s32.totalorder %v26, 4294967196
    %vm54 = vcmp.ne.s32.totalorder %v27, 4294967196
    %vm55 = vcmp.ne.s32.totalorder %v28, 4294967196
    %vm56 = vcmp.ne.s32.totalorder %v29, 4294967196
    %vm57 = vcmp.ne.s32.totalorder %v30, 4294967196
    %vm58 = vcmp.lt.s32.totalorder %v42, 64
    %vm59 = vcmp.lt.s32.totalorder %v43, 64
    %vm60 = vcmp.lt.s32.totalorder %v44, 64
    %vm61 = vcmp.lt.s32.totalorder %v45, 64
    %vm62 = vcmp.lt.s32.totalorder %v46, 64
    %vm63 = vcmp.lt.s32.totalorder %v47, 64
    %vm64 = vcmp.lt.s32.totalorder %v48, 64
    %vm65 = vcmp.lt.s32.totalorder %v49, 64
    %vm66 = vmand %vm50, %vm58
    %vm67 = vmand %vm51, %vm59
    %vm68 = vmand %vm52, %vm60
    %vm69 = vmand %vm53, %vm61
    %vm70 = vmand %vm54, %vm62
    %vm71 = vmand %vm55, %vm63
    %vm72 = vmand %vm56, %vm64
    %vm73 = vmand %vm57, %vm65
    %vm74 = vcmask 261120
    %v75 = vsel %vm74, %v15, -inf
    %76 = vmax.xlane.f32.xlu0 %v75
    %v77 = vpop.xlane.xlu0 %76
    %v78 = vsel %vm74, %v16, -inf
    %79 = vmax.xlane.f32.xlu0 %v78
    %v80 = vpop.xlane.xlu0 %79
    %v81 = vsel %vm74, %v17, -inf
    %82 = vmax.xlane.f32.xlu0 %v81
    %v83 = vpop.xlane.xlu0 %82
    %v84 = vsel %vm74, %v18, -inf
    %85 = vmax.xlane.f32.xlu0 %v84
    %v86 = vpop.xlane.xlu0 %85
    %v87 = vsel %vm74, %v19, -inf
    %88 = vmax.xlane.f32.xlu0 %v87
    %v89 = vpop.xlane.xlu0 %88
    %v90 = vsel %vm74, %v20, -inf
    %91 = vmax.xlane.f32.xlu0 %v90
    %v92 = vpop.xlane.xlu0 %91
    %v93 = vsel %vm74, %v21, -inf
    %94 = vmax.xlane.f32.xlu0 %v93
    %v95 = vpop.xlane.xlu0 %94
    %v96 = vsel %vm74, %v22, -inf
    %97 = vmax.xlane.f32.xlu0 %v96
    %v98 = vpop.xlane.xlu0 %97
    %v99 = vsub.f32 %v15, %v77
    %v100 = vsub.f32 %v16, %v80
    %v101 = vsub.f32 %v17, %v83
    %v102 = vsub.f32 %v18, %v86
    %v103 = vsub.f32 %v19, %v89
    %v104 = vsub.f32 %v20, %v92
    %v105 = vsub.f32 %v21, %v95
    %v106 = vsub.f32 %v22, %v98
    %v107 = vmul.f32 %v99, 1.442695
    %v108 = vpow.pop %v107
    %v109 = vmul.f32 %v100, 1.442695
    %v110 = vpow.pop %v109
    %v111 = vmul.f32 %v101, 1.442695
    %v112 = vpow.pop %v111
    %v113 = vmul.f32 %v102, 1.442695
    %v114 = vpow.pop %v113
    %v115 = vmul.f32 %v103, 1.442695
    %v116 = vpow.pop %v115
    %v117 = vmul.f32 %v104, 1.442695
    %v118 = vpow.pop %v117
    %v119 = vmul.f32 %v105, 1.442695
    %v120 = vpow.pop %v119
    %v121 = vmul.f32 %v106, 1.442695
    %v122 = vpow.pop %v121
    %v123 = vsel %vm74, %v108, 0.0
    %124 = vadd.xlane.f32.xlu0 %v123
    %v125 = vpop.xlane.xlu0 %124
    %v126 = vsel %vm74, %v110, 0.0
    %127 = vadd.xlane.f32.xlu0 %v126
    %v128 = vpop.xlane.xlu0 %127
    %v129 = vsel %vm74, %v112, 0.0
    %130 = vadd.xlane.f32.xlu0 %v129
    %v131 = vpop.xlane.xlu0 %130
    %v132 = vsel %vm74, %v114, 0.0
    %133 = vadd.xlane.f32.xlu0 %v132
    %v134 = vpop.xlane.xlu0 %133
    %v135 = vsel %vm74, %v116, 0.0
    %136 = vadd.xlane.f32.xlu0 %v135
    %v137 = vpop.xlane.xlu0 %136
    %v138 = vsel %vm74, %v118, 0.0
    %139 = vadd.xlane.f32.xlu0 %v138
    %v140 = vpop.xlane.xlu0 %139
    %v141 = vsel %vm74, %v120, 0.0
    %142 = vadd.xlane.f32.xlu0 %v141
    %v143 = vpop.xlane.xlu0 %142
    %v144 = vsel %vm74, %v122, 0.0
    %145 = vadd.xlane.f32.xlu0 %v144
    %v146 = vpop.xlane.xlu0 %145
    %v147 = vlaneseq
    %v148 = vand.u32 %v147, 127
    %149 = vset.pattern.permute.xlu0 0
    %150 = vperm.xlu0 %149, %v23
    %v151 = vpop.permute.xlu0 %150
    %152 = vset.pattern.permute.xlu0 0
    %153 = vperm.xlu0 %152, %v24
    %v154 = vpop.permute.xlu0 %153
    %155 = vset.pattern.permute.xlu0 0
    %156 = vperm.xlu0 %155, %v25
    %v157 = vpop.permute.xlu0 %156
    %158 = vset.pattern.permute.xlu0 0
    %159 = vperm.xlu0 %158, %v26
    %v160 = vpop.permute.xlu0 %159
    %161 = vset.pattern.permute.xlu0 0
    %162 = vperm.xlu0 %161, %v27
    %v163 = vpop.permute.xlu0 %162
    %164 = vset.pattern.permute.xlu0 0
    %165 = vperm.xlu0 %164, %v28
    %v166 = vpop.permute.xlu0 %165
    %167 = vset.pattern.permute.xlu0 0
    %168 = vperm.xlu0 %167, %v29
    %v169 = vpop.permute.xlu0 %168
    %170 = vset.pattern.permute.xlu0 0
    %171 = vperm.xlu0 %170, %v30
    %v172 = vpop.permute.xlu0 %171
    %vm173 = vcmp.eq.s32.totalorder %v148, %v151
    %vm174 = vcmp.eq.s32.totalorder %v148, %v154
    %vm175 = vcmp.eq.s32.totalorder %v148, %v157
    %vm176 = vcmp.eq.s32.totalorder %v148, %v160
    %vm177 = vcmp.eq.s32.totalorder %v148, %v163
    %vm178 = vcmp.eq.s32.totalorder %v148, %v166
    %vm179 = vcmp.eq.s32.totalorder %v148, %v169
    %vm180 = vcmp.eq.s32.totalorder %v148, %v172
    %v181 = vsel %vm173, %v108, 0.0
    %v182 = vsel %vm174, %v110, 0.0
    %v183 = vsel %vm175, %v112, 0.0
    %v184 = vsel %vm176, %v114, 0.0
    %v185 = vsel %vm177, %v116, 0.0
    %v186 = vsel %vm178, %v118, 0.0
    %v187 = vsel %vm179, %v120, 0.0
    %v188 = vsel %vm180, %v122, 0.0
    %v189 = vsel %vm74, %v181, 0.0
    %190 = vadd.xlane.f32.xlu0 %v189
    %v191 = vpop.xlane.xlu0 %190
    %v192 = vsel %vm74, %v182, 0.0
    %193 = vadd.xlane.f32.xlu0 %v192
    %v194 = vpop.xlane.xlu0 %193
    %v195 = vsel %vm74, %v183, 0.0
    %196 = vadd.xlane.f32.xlu0 %v195
    %v197 = vpop.xlane.xlu0 %196
    %v198 = vsel %vm74, %v184, 0.0
    %199 = vadd.xlane.f32.xlu0 %v198
    %v200 = vpop.xlane.xlu0 %199
    %v201 = vsel %vm74, %v185, 0.0
    %202 = vadd.xlane.f32.xlu0 %v201
    %v203 = vpop.xlane.xlu0 %202
    %v204 = vsel %vm74, %v186, 0.0
    %205 = vadd.xlane.f32.xlu0 %v204
    %v206 = vpop.xlane.xlu0 %205
    %v207 = vsel %vm74, %v187, 0.0
    %208 = vadd.xlane.f32.xlu0 %v207
    %v209 = vpop.xlane.xlu0 %208
    %v210 = vsel %vm74, %v188, 0.0
    %211 = vadd.xlane.f32.xlu0 %v210
    %v212 = vpop.xlane.xlu0 %211
    %v213 = vlog2.pop %v191
    %v214 = vmul.f32 %v213, 0.6931472
    %v215 = vlog2.pop %v194
    %v216 = vmul.f32 %v215, 0.6931472
    %v217 = vlog2.pop %v197
    %v218 = vmul.f32 %v217, 0.6931472
    %v219 = vlog2.pop %v200
    %v220 = vmul.f32 %v219, 0.6931472
    %v221 = vlog2.pop %v203
    %v222 = vmul.f32 %v221, 0.6931472
    %v223 = vlog2.pop %v206
    %v224 = vmul.f32 %v223, 0.6931472
    %v225 = vlog2.pop %v209
    %v226 = vmul.f32 %v225, 0.6931472
    %v227 = vlog2.pop %v212
    %v228 = vmul.f32 %v227, 0.6931472
    %v229 = vlog2.pop %v125
    %v230 = vmul.f32 %v229, 0.6931472
    %v231 = vlog2.pop %v128
    %v232 = vmul.f32 %v231, 0.6931472
    %v233 = vlog2.pop %v131
    %v234 = vmul.f32 %v233, 0.6931472
    %v235 = vlog2.pop %v134
    %v236 = vmul.f32 %v235, 0.6931472
    %v237 = vlog2.pop %v137
    %v238 = vmul.f32 %v237, 0.6931472
    %v239 = vlog2.pop %v140
    %v240 = vmul.f32 %v239, 0.6931472
    %v241 = vlog2.pop %v143
    %v242 = vmul.f32 %v241, 0.6931472
    %v243 = vlog2.pop %v146
    %v244 = vmul.f32 %v243, 0.6931472
    %v245 = vsub.f32 %v214, %v230
    %v246 = vsub.f32 %v216, %v232
    %v247 = vsub.f32 %v218, %v234
    %v248 = vsub.f32 %v220, %v236
    %v249 = vsub.f32 %v222, %v238
    %v250 = vsub.f32 %v224, %v240
    %v251 = vsub.f32 %v226, %v242
    %v252 = vsub.f32 %v228, %v244
    %v253 = vmul.f32 %v245, 0.7
    %v254 = vmul.f32 %v246, 0.7
    %v255 = vmul.f32 %v247, 0.7
    %v256 = vmul.f32 %v248, 0.7
    %v257 = vmul.f32 %v249, 0.7
    %v258 = vmul.f32 %v250, 0.7
    %v259 = vmul.f32 %v251, 0.7
    %v260 = vmul.f32 %v252, 0.7
    %v261 = vmul.f32 %v253, 1.442695
    %v262 = vpow.pop %v261
    %v263 = vmul.f32 %v254, 1.442695
    %v264 = vpow.pop %v263
    %v265 = vmul.f32 %v255, 1.442695
    %v266 = vpow.pop %v265
    %v267 = vmul.f32 %v256, 1.442695
    %v268 = vpow.pop %v267
    %v269 = vmul.f32 %v257, 1.442695
    %v270 = vpow.pop %v269
    %v271 = vmul.f32 %v258, 1.442695
    %v272 = vpow.pop %v271
    %v273 = vmul.f32 %v259, 1.442695
    %v274 = vpow.pop %v273
    %v275 = vmul.f32 %v260, 1.442695
    %v276 = vpow.pop %v275
    %v277 = vsub.f32 1.0, %v262
    %v278 = vsub.f32 1.0, %v264
    %v279 = vsub.f32 1.0, %v266
    %v280 = vsub.f32 1.0, %v268
    %v281 = vsub.f32 1.0, %v270
    %v282 = vsub.f32 1.0, %v272
    %v283 = vsub.f32 1.0, %v274
    %v284 = vsub.f32 1.0, %v276
    %v285 = vrcp.pop 0.7
    %v286 = vmul.f32 %v277, %v285
    %v287 = vmul.f32 %v278, %v285
    %v288 = vmul.f32 %v279, %v285
    %v289 = vmul.f32 %v280, %v285
    %v290 = vmul.f32 %v281, %v285
    %v291 = vmul.f32 %v282, %v285
    %v292 = vmul.f32 %v283, %v285
    %v293 = vmul.f32 %v284, %v285
    %v294 = vsel %vm66, %v286, 0.0
    %v295 = vsel %vm67, %v287, 0.0
    %v296 = vsel %vm68, %v288, 0.0
    %v297 = vsel %vm69, %v289, 0.0
    %v298 = vsel %vm70, %v290, 0.0
    %v299 = vsel %vm71, %v291, 0.0
    %v300 = vsel %vm72, %v292, 0.0
    %v301 = vsel %vm73, %v293, 0.0
    %vm302 = vcmask 7168
    %v303 = vsel %vm302, %v294, 0.0
    %v304 = vsel %vm302, %v295, 0.0
    %v305 = vadd.f32 %v303, %v304
    %v306 = vsel %vm302, %v296, 0.0
    %v307 = vadd.f32 %v305, %v306
    %v308 = vsel %vm302, %v297, 0.0
    %v309 = vadd.f32 %v307, %v308
    %v310 = vsel %vm302, %v298, 0.0
    %v311 = vadd.f32 %v309, %v310
    %v312 = vsel %vm302, %v299, 0.0
    %v313 = vadd.f32 %v311, %v312
    %v314 = vsel %vm302, %v300, 0.0
    %v315 = vadd.f32 %v313, %v314
    %v316 = vsel %vm302, %v301, 0.0
    %v317 = vadd.f32 %v315, %v316
    %318 = vadd.xlane.f32.xlu0 %v317
    %v319 = vpop.xlane.xlu0 %318
    %v320 = vrot.slane %v319, 4
    %v321 = vadd.f32 %v319, %v320
    %v322 = vrot.slane %v321, 2
    %v323 = vadd.f32 %v321, %v322
    %v324 = vrot.slane %v323, 1
    %v325 = vadd.f32 %v323, %v324
    %s326 = vtos %v325
    %v327 = vsel %vm66, 1, 0
    %v328 = vsel %vm67, 1, 0
    %v329 = vsel %vm68, 1, 0
    %v330 = vsel %vm69, 1, 0
    %v331 = vsel %vm70, 1, 0
    %v332 = vsel %vm71, 1, 0
    %v333 = vsel %vm72, 1, 0
    %v334 = vsel %vm73, 1, 0
    %v335 = vcvt.s32.f32 %v327
    %v336 = vcvt.s32.f32 %v328
    %v337 = vcvt.s32.f32 %v329
    %v338 = vcvt.s32.f32 %v330
    %v339 = vcvt.s32.f32 %v331
    %v340 = vcvt.s32.f32 %v332
    %v341 = vcvt.s32.f32 %v333
    %v342 = vcvt.s32.f32 %v334
    %v343 = vsel %vm302, %v335, 0.0
    %v344 = vsel %vm302, %v336, 0.0
    %v345 = vadd.f32 %v343, %v344
    %v346 = vsel %vm302, %v337, 0.0
    %v347 = vadd.f32 %v345, %v346
    %v348 = vsel %vm302, %v338, 0.0
    %v349 = vadd.f32 %v347, %v348
    %v350 = vsel %vm302, %v339, 0.0
    %v351 = vadd.f32 %v349, %v350
    %v352 = vsel %vm302, %v340, 0.0
    %v353 = vadd.f32 %v351, %v352
    %v354 = vsel %vm302, %v341, 0.0
    %v355 = vadd.f32 %v353, %v354
    %v356 = vsel %vm302, %v342, 0.0
    %v357 = vadd.f32 %v355, %v356
    %358 = vadd.xlane.f32.xlu0 %v357
    %v359 = vpop.xlane.xlu0 %358
    %v360 = vrot.slane %v359, 4
    %v361 = vadd.f32 %v359, %v360
    %v362 = vrot.slane %v361, 2
    %v363 = vadd.f32 %v361, %v362
    %v364 = vrot.slane %v363, 1
    %v365 = vadd.f32 %v363, %v364
    %s366 = vtos %v365
    %v367 = vstv %s326
    %368 = vst [vmem:[#allocation2] sm:$0x1] %v367
    %v369 = vstv %s366
    %370 = vst [vmem:[#allocation4] sm:$0x1] %v369
    // Predicated region
    $region10: #{tpu_custom_call.1} parent=1 // pred_check
      _
    $region11: #{tpu_custom_call.1} parent=1 // pred_check_branch
      %372 = sbr.rel (0) target = $region13
    $region12: #{tpu_custom_call.1} parent=1 // pred_region
      %s374 = ssub.s32 16, 16
      %375 = vsyncadd [#allocation3], %s374
      %s377 = sshll.u32 [#allocation2], 4
      %s378 = int_to_ptr.vmem [resolvable:$true] %s377
      %380 = dma.vmem_to_hbm [thread:$0]  %s378, 16, %s2, [#allocation3]
    $region13: #{tpu_custom_call.1} parent=1 // pred_fallthru
      _
    // Predicated region
    $region14: #{tpu_custom_call.1} parent=1 // pred_check
      _
    $region15: #{tpu_custom_call.1} parent=1 // pred_check_branch
      %382 = sbr.rel (0) target = $region17
    $region16: #{tpu_custom_call.1} parent=1 // pred_region
      %s384 = ssub.s32 16, 16
      %385 = vsyncadd [#allocation5], %s384
      %s387 = sshll.u32 [#allocation4], 4
      %s388 = int_to_ptr.vmem [resolvable:$true] %s387
      %390 = dma.vmem_to_hbm [thread:$0]  %s388, 16, %s3, [#allocation5]
    $region17: #{tpu_custom_call.1} parent=1 // pred_fallthru
      _
    // Predicated region
    $region18: #{tpu_custom_call.1} parent=1 // pred_check
      _
    $region19: #{tpu_custom_call.1} parent=1 // pred_check_branch
      %392 = sbr.rel (0) target = $region21
    $region20: #{tpu_custom_call.1} parent=1 // pred_region
      %393 = dma.done [#allocation3], 16
    $region21: #{tpu_custom_call.1} parent=1 // pred_fallthru
      _
    // Predicated region
    $region22: #{tpu_custom_call.1} parent=1 // pred_check
      _
    $region23: #{tpu_custom_call.1} parent=1 // pred_check_branch
      %395 = sbr.rel (0) target = $region25
    $region24: #{tpu_custom_call.1} parent=1 // pred_region
      %396 = dma.done [#allocation5], 16
    $region25: #{tpu_custom_call.1} parent=1 // pred_fallthru
      _
    %397 = vsyncpa [#allocation3], 1
    %398 = vsyncpa [#allocation5], 1

</llo_original>
